<compile_context>
chip_gen: v7x
topology: tpu7x:2x2x1
jax: 0.10.0
libtpu: 0.0.40
codegen_flags: <defaults>
</compile_context>

<pallas_src>
import functools

import jax
import jax.numpy as jnp
from jax.experimental import pallas as pl
from jax.experimental.pallas import tpu as pltpu


def _encoder_lstm_kernel(x_ref, wih_ref, whh_ref, b_ref, hc_ref):
    """Whole-sequence LSTM recurrence in one kernel invocation.

    x_ref   : (T*Bp, D)   time-major, batch-padded input (compute dtype)
    wih_ref : (D, 4H)     W_ih^T (compute dtype)
    whh_ref : (H, 4H)     W_hh^T (f32 — kept f32 for the serial recurrence)
    b_ref   : (1, 4H)     b_ih + b_hh (f32)
    hc_ref  : (Bp, 2H)    packed output: lanes [0:H] = final h, [H:2H] = final c (f32)
    """
    TB, _ = x_ref.shape
    Bp = hc_ref.shape[0]
    H = hc_ref.shape[1] // 2
    T = TB // Bp

    # Hoisted input projection: one MXU call covering every timestep, bias folded in.
    pre = jnp.dot(x_ref[...], wih_ref[...],
                  preferred_element_type=jnp.float32) + b_ref[...]      # (T*Bp, 4H) f32

    whh = whh_ref[...]                                                   # (H, 4H) f32, resident

    h = jnp.zeros((Bp, H), jnp.float32)
    c = jnp.zeros((Bp, H), jnp.float32)

    # T is small and static -> full unroll; per step only the recurrent
    # h @ W_hh^T matmul (K=H, N=4H=128 lanes) + elementwise gate math remain.
    # Each pre-slice is a static, sublane-group-aligned (Bp=8) vreg read.
    for t in range(T):
        gates = pre[t * Bp:(t + 1) * Bp, :] + jnp.dot(
            h, whh, preferred_element_type=jnp.float32)                  # (Bp, 4H)
        sig = jax.nn.sigmoid(gates)   # one full-slab EUP pass (covers i, f, o)
        tnh = jnp.tanh(gates)         # one full-slab EUP pass (covers g)
        i_g = sig[:, 0 * H:1 * H]
        f_g = sig[:, 1 * H:2 * H]
        g_g = tnh[:, 2 * H:3 * H]
        o_g = sig[:, 3 * H:4 * H]
        c = f_g * c + i_g * g_g
        h = o_g * jnp.tanh(c)

    # Single lane-contiguous (Bp, 2H) slab: one store, one writeback DMA.
    hc_ref[...] = jnp.concatenate([h, c], axis=-1)


def prepare_encoder_params(w_ih, w_hh, b_ih, b_hh, *, compute_dtype=jnp.float32):
    """One-time (per parameter set) weight prep, hoisted out of the forward path.

    w_ih : (4H, D), w_hh : (4H, H), b_ih/b_hh : (4H,)  -- PyTorch nn.LSTM layout.
    Returns (W_ih^T, W_hh^T, b_ih + b_hh).  Only W_ih^T takes compute_dtype;
    the recurrent weight stays f32 (fastest + most accurate for the serial chain).
    """
    four_h = w_ih.shape[0]
    wih_t = jnp.transpose(w_ih).astype(compute_dtype)           # (D, 4H)
    whh_t = jnp.transpose(w_hh).astype(jnp.float32)             # (H, 4H)
    bias = (b_ih + b_hh).reshape(1, four_h).astype(jnp.float32)  # (1, 4H)
    return wih_t, whh_t, bias


@functools.partial(jax.jit, static_argnames=("compute_dtype",))
def encoder_forward(x_btd, wih_t, whh_t, bias, *, compute_dtype=jnp.float32):
    """LSTM encoder forward with pre-prepared weights.

    x_btd: (B, T, D).  Returns (hidden, cell), each (1, B, H) f32 — matching
    `outputs, (hidden, cell) = nn.LSTM(...)(x); return (hidden, cell)`.
    """
    B, T, D = x_btd.shape
    H = whh_t.shape[0]

    # Pad batch up to a full f32 sublane group (8), go time-major, flatten, cast.
    # These fuse into the pre-kernel XLA prologue.
    Bp = ((B + 7) // 8) * 8
    x_p = x_btd.astype(compute_dtype)
    if Bp != B:
        x_p = jnp.pad(x_p, ((0, Bp - B), (0, 0), (0, 0)))
    x_tm = jnp.transpose(x_p, (1, 0, 2)).reshape(T * Bp, D)      # (T*Bp, D)

    hc = pl.pallas_call(
        _encoder_lstm_kernel,
        out_shape=jax.ShapeDtypeStruct((Bp, 2 * H), jnp.float32),
        in_specs=[
            pl.BlockSpec(memory_space=pltpu.MemorySpace.VMEM),   # x (time-major, flat)
            pl.BlockSpec(memory_space=pltpu.MemorySpace.VMEM),   # W_ih^T
            pl.BlockSpec(memory_space=pltpu.MemorySpace.VMEM),   # W_hh^T
            pl.BlockSpec(memory_space=pltpu.MemorySpace.VMEM),   # bias
        ],
        out_specs=pl.BlockSpec(memory_space=pltpu.MemorySpace.VMEM),
    )(x_tm, wih_t, whh_t, bias)

    hidden = hc[:B, :H][None]       # (1, B, H)
    cell = hc[:B, H:][None]         # (1, B, H)
    return hidden, cell


def _reference_lstm(x_btd, w_ih, w_hh, b_ih, b_hh):
    """Pure-JAX reference of PyTorch nn.LSTM (1 layer, batch_first)."""
    B, T, D = x_btd.shape
    H = w_hh.shape[1]
    h = jnp.zeros((B, H), jnp.float32)
    c = jnp.zeros((B, H), jnp.float32)

    def step(carry, x_t):
        h, c = carry
        gates = x_t @ w_ih.T + h @ w_hh.T + b_ih + b_hh
        i = jax.nn.sigmoid(gates[:, 0 * H:1 * H])
        f = jax.nn.sigmoid(gates[:, 1 * H:2 * H])
        g = jnp.tanh(gates[:, 2 * H:3 * H])
        o = jax.nn.sigmoid(gates[:, 3 * H:4 * H])
        c = f * c + i * g
        h = o * jnp.tanh(c)
        return (h, c), None

    (h, c), _ = jax.lax.scan(step, (h, c), jnp.transpose(x_btd, (1, 0, 2)))
    return h[None], c[None]


if __name__ == "__main__":
    # Shapes consistent with the module: Encoder(input_dim=8, embedding_dim=32)
    B, T, D, H = 2, 8, 8, 32

    key = jax.random.PRNGKey(0)
    kx, k1, k2, k3, k4 = jax.random.split(key, 5)

    # Deterministic parameter init (uniform, scaled like PyTorch's 1/sqrt(H)).
    bound = 1.0 / (H ** 0.5)
    x = jax.random.normal(kx, (B, T, D), dtype=jnp.float32)
    w_ih = jax.random.uniform(k1, (4 * H, D), jnp.float32, -bound, bound)
    w_hh = jax.random.uniform(k2, (4 * H, H), jnp.float32, -bound, bound)
    b_ih = jax.random.uniform(k3, (4 * H,), jnp.float32, -bound, bound)
    b_hh = jax.random.uniform(k4, (4 * H,), jnp.float32, -bound, bound)

    h_ref, c_ref = _reference_lstm(x, w_ih, w_hh, b_ih, b_hh)

    # f32 path (exact vs. reference).  Weight prep done ONCE, outside the forward.
    params_f32 = prepare_encoder_params(w_ih, w_hh, b_ih, b_hh,
                                        compute_dtype=jnp.float32)
    hidden, cell = encoder_forward(x, *params_f32, compute_dtype=jnp.float32)
    jax.block_until_ready((hidden, cell))

    assert hidden.shape == (1, B, H) and cell.shape == (1, B, H)
    assert jnp.allclose(hidden, h_ref, atol=1e-5, rtol=1e-5)
    assert jnp.allclose(cell, c_ref, atol=1e-5, rtol=1e-5)

    # bf16 path: bf16 only for the hoisted input projection (bf16-native MXUs on
    # v6e/v7x); the recurrence (W_hh, h, c) stays f32 — no per-step casts.
    params_bf16 = prepare_encoder_params(w_ih, w_hh, b_ih, b_hh,
                                         compute_dtype=jnp.bfloat16)
    hidden_bf, cell_bf = encoder_forward(x, *params_bf16,
                                         compute_dtype=jnp.bfloat16)
    jax.block_until_ready((hidden_bf, cell_bf))
    assert jnp.allclose(hidden_bf, h_ref, atol=5e-2, rtol=5e-2)  # loose: bf16 projection
    assert jnp.allclose(cell_bf, c_ref, atol=5e-2, rtol=5e-2)

    print("KERNEL_OK")
</pallas_src>

<mosaic_0001>
module attributes {stable_mosaic.version = 11 : i64} {
  func.func @_encoder_lstm_kernel(%arg0: memref<64x8xf32, #tpu.memory_space<vmem>>, %arg1: memref<8x128xf32, #tpu.memory_space<vmem>>, %arg2: memref<32x128xf32, #tpu.memory_space<vmem>>, %arg3: memref<1x128xf32, #tpu.memory_space<vmem>>, %arg4: memref<8x64xf32, #tpu.memory_space<vmem>>) attributes {dimension_semantics = [], scalar_prefetch = 0 : i64, scratch_operands = 0 : i64, tpu.core_type = #tpu.core_type<tc>} {
    %c0 = arith.constant 0 : index
    %c0_0 = arith.constant 0 : index
    %0 = vector.load %arg0[%c0, %c0_0] : memref<64x8xf32, #tpu.memory_space<vmem>>, vector<64x8xf32>
    %c0_1 = arith.constant 0 : index
    %c0_2 = arith.constant 0 : index
    %1 = vector.load %arg1[%c0_1, %c0_2] : memref<8x128xf32, #tpu.memory_space<vmem>>, vector<8x128xf32>
    %cst = arith.constant dense<0.000000e+00> : vector<64x128xf32>
    %2 = tpu.matmul %0, %1, %cst {dimension_numbers = #tpu.dot_dimension_numbers<[1], [0], [0], [1], [0, 0, 1, 1], [], []>} : vector<64x8xf32>, vector<8x128xf32>, vector<64x128xf32> -> vector<64x128xf32>
    %c0_3 = arith.constant 0 : index
    %c0_4 = arith.constant 0 : index
    %3 = vector.load %arg3[%c0_3, %c0_4] : memref<1x128xf32, #tpu.memory_space<vmem>>, vector<1x128xf32>
    %4 = vector.broadcast %3 : vector<1x128xf32> to vector<64x128xf32>
    %5 = arith.addf %2, %4 : vector<64x128xf32>
    %c0_5 = arith.constant 0 : index
    %c0_6 = arith.constant 0 : index
    %6 = vector.load %arg2[%c0_5, %c0_6] : memref<32x128xf32, #tpu.memory_space<vmem>>, vector<32x128xf32>
    %cst_7 = arith.constant 0.000000e+00 : f32
    %7 = vector.broadcast %cst_7 : f32 to vector<8x32xf32>
    %cst_8 = arith.constant 0.000000e+00 : f32
    %8 = vector.broadcast %cst_8 : f32 to vector<8x32xf32>
    %9 = vector.extract_strided_slice %5 {offsets = [0, 0], sizes = [8, 128], strides = [1, 1]} : vector<64x128xf32> to vector<8x128xf32>
    %cst_9 = arith.constant dense<0.000000e+00> : vector<8x128xf32>
    %10 = tpu.matmul %7, %6, %cst_9 {dimension_numbers = #tpu.dot_dimension_numbers<[1], [0], [0], [1], [0, 0, 1, 1], [], []>} : vector<8x32xf32>, vector<32x128xf32>, vector<8x128xf32> -> vector<8x128xf32>
    %11 = arith.addf %9, %10 : vector<8x128xf32>
    %12 = arith.negf %11 : vector<8x128xf32>
    %13 = math.exp %12 : vector<8x128xf32>
    %cst_10 = arith.constant 1.000000e+00 : f32
    %14 = vector.broadcast %cst_10 : f32 to vector<8x128xf32>
    %15 = arith.addf %14, %13 : vector<8x128xf32>
    %16 = arith.divf %14, %15 : vector<8x128xf32>
    %17 = math.tanh %11 : vector<8x128xf32>
    %18 = vector.extract_strided_slice %16 {offsets = [0, 0], sizes = [8, 32], strides = [1, 1]} : vector<8x128xf32> to vector<8x32xf32>
    %19 = vector.extract_strided_slice %16 {offsets = [0, 32], sizes = [8, 32], strides = [1, 1]} : vector<8x128xf32> to vector<8x32xf32>
    %20 = vector.extract_strided_slice %17 {offsets = [0, 64], sizes = [8, 32], strides = [1, 1]} : vector<8x128xf32> to vector<8x32xf32>
    %21 = vector.extract_strided_slice %16 {offsets = [0, 96], sizes = [8, 32], strides = [1, 1]} : vector<8x128xf32> to vector<8x32xf32>
    %22 = arith.mulf %19, %8 : vector<8x32xf32>
    %23 = arith.mulf %18, %20 : vector<8x32xf32>
    %24 = arith.addf %22, %23 : vector<8x32xf32>
    %25 = math.tanh %24 : vector<8x32xf32>
    %26 = arith.mulf %21, %25 : vector<8x32xf32>
    %27 = vector.extract_strided_slice %5 {offsets = [8, 0], sizes = [8, 128], strides = [1, 1]} : vector<64x128xf32> to vector<8x128xf32>
    %cst_11 = arith.constant dense<0.000000e+00> : vector<8x128xf32>
    %28 = tpu.matmul %26, %6, %cst_11 {dimension_numbers = #tpu.dot_dimension_numbers<[1], [0], [0], [1], [0, 0, 1, 1], [], []>} : vector<8x32xf32>, vector<32x128xf32>, vector<8x128xf32> -> vector<8x128xf32>
    %29 = arith.addf %27, %28 : vector<8x128xf32>
    %30 = arith.negf %29 : vector<8x128xf32>
    %31 = math.exp %30 : vector<8x128xf32>
    %cst_12 = arith.constant 1.000000e+00 : f32
    %32 = vector.broadcast %cst_12 : f32 to vector<8x128xf32>
    %33 = arith.addf %32, %31 : vector<8x128xf32>
    %34 = arith.divf %32, %33 : vector<8x128xf32>
    %35 = math.tanh %29 : vector<8x128xf32>
    %36 = vector.extract_strided_slice %34 {offsets = [0, 0], sizes = [8, 32], strides = [1, 1]} : vector<8x128xf32> to vector<8x32xf32>
    %37 = vector.extract_strided_slice %34 {offsets = [0, 32], sizes = [8, 32], strides = [1, 1]} : vector<8x128xf32> to vector<8x32xf32>
    %38 = vector.extract_strided_slice %35 {offsets = [0, 64], sizes = [8, 32], strides = [1, 1]} : vector<8x128xf32> to vector<8x32xf32>
    %39 = vector.extract_strided_slice %34 {offsets = [0, 96], sizes = [8, 32], strides = [1, 1]} : vector<8x128xf32> to vector<8x32xf32>
    %40 = arith.mulf %37, %24 : vector<8x32xf32>
    %41 = arith.mulf %36, %38 : vector<8x32xf32>
    %42 = arith.addf %40, %41 : vector<8x32xf32>
    %43 = math.tanh %42 : vector<8x32xf32>
    %44 = arith.mulf %39, %43 : vector<8x32xf32>
    %45 = vector.extract_strided_slice %5 {offsets = [16, 0], sizes = [8, 128], strides = [1, 1]} : vector<64x128xf32> to vector<8x128xf32>
    %cst_13 = arith.constant dense<0.000000e+00> : vector<8x128xf32>
    %46 = tpu.matmul %44, %6, %cst_13 {dimension_numbers = #tpu.dot_dimension_numbers<[1], [0], [0], [1], [0, 0, 1, 1], [], []>} : vector<8x32xf32>, vector<32x128xf32>, vector<8x128xf32> -> vector<8x128xf32>
    %47 = arith.addf %45, %46 : vector<8x128xf32>
    %48 = arith.negf %47 : vector<8x128xf32>
    %49 = math.exp %48 : vector<8x128xf32>
    %cst_14 = arith.constant 1.000000e+00 : f32
    %50 = vector.broadcast %cst_14 : f32 to vector<8x128xf32>
    %51 = arith.addf %50, %49 : vector<8x128xf32>
    %52 = arith.divf %50, %51 : vector<8x128xf32>
    %53 = math.tanh %47 : vector<8x128xf32>
    %54 = vector.extract_strided_slice %52 {offsets = [0, 0], sizes = [8, 32], strides = [1, 1]} : vector<8x128xf32> to vector<8x32xf32>
    %55 = vector.extract_strided_slice %52 {offsets = [0, 32], sizes = [8, 32], strides = [1, 1]} : vector<8x128xf32> to vector<8x32xf32>
    %56 = vector.extract_strided_slice %53 {offsets = [0, 64], sizes = [8, 32], strides = [1, 1]} : vector<8x128xf32> to vector<8x32xf32>
    %57 = vector.extract_strided_slice %52 {offsets = [0, 96], sizes = [8, 32], strides = [1, 1]} : vector<8x128xf32> to vector<8x32xf32>
    %58 = arith.mulf %55, %42 : vector<8x32xf32>
    %59 = arith.mulf %54, %56 : vector<8x32xf32>
    %60 = arith.addf %58, %59 : vector<8x32xf32>
    %61 = math.tanh %60 : vector<8x32xf32>
    %62 = arith.mulf %57, %61 : vector<8x32xf32>
    %63 = vector.extract_strided_slice %5 {offsets = [24, 0], sizes = [8, 128], strides = [1, 1]} : vector<64x128xf32> to vector<8x128xf32>
    %cst_15 = arith.constant dense<0.000000e+00> : vector<8x128xf32>
    %64 = tpu.matmul %62, %6, %cst_15 {dimension_numbers = #tpu.dot_dimension_numbers<[1], [0], [0], [1], [0, 0, 1, 1], [], []>} : vector<8x32xf32>, vector<32x128xf32>, vector<8x128xf32> -> vector<8x128xf32>
    %65 = arith.addf %63, %64 : vector<8x128xf32>
    %66 = arith.negf %65 : vector<8x128xf32>
    %67 = math.exp %66 : vector<8x128xf32>
    %cst_16 = arith.constant 1.000000e+00 : f32
    %68 = vector.broadcast %cst_16 : f32 to vector<8x128xf32>
    %69 = arith.addf %68, %67 : vector<8x128xf32>
    %70 = arith.divf %68, %69 : vector<8x128xf32>
    %71 = math.tanh %65 : vector<8x128xf32>
    %72 = vector.extract_strided_slice %70 {offsets = [0, 0], sizes = [8, 32], strides = [1, 1]} : vector<8x128xf32> to vector<8x32xf32>
    %73 = vector.extract_strided_slice %70 {offsets = [0, 32], sizes = [8, 32], strides = [1, 1]} : vector<8x128xf32> to vector<8x32xf32>
    %74 = vector.extract_strided_slice %71 {offsets = [0, 64], sizes = [8, 32], strides = [1, 1]} : vector<8x128xf32> to vector<8x32xf32>
    %75 = vector.extract_strided_slice %70 {offsets = [0, 96], sizes = [8, 32], strides = [1, 1]} : vector<8x128xf32> to vector<8x32xf32>
    %76 = arith.mulf %73, %60 : vector<8x32xf32>
    %77 = arith.mulf %72, %74 : vector<8x32xf32>
    %78 = arith.addf %76, %77 : vector<8x32xf32>
    %79 = math.tanh %78 : vector<8x32xf32>
    %80 = arith.mulf %75, %79 : vector<8x32xf32>
    %81 = vector.extract_strided_slice %5 {offsets = [32, 0], sizes = [8, 128], strides = [1, 1]} : vector<64x128xf32> to vector<8x128xf32>
    %cst_17 = arith.constant dense<0.000000e+00> : vector<8x128xf32>
    %82 = tpu.matmul %80, %6, %cst_17 {dimension_numbers = #tpu.dot_dimension_numbers<[1], [0], [0], [1], [0, 0, 1, 1], [], []>} : vector<8x32xf32>, vector<32x128xf32>, vector<8x128xf32> -> vector<8x128xf32>
    %83 = arith.addf %81, %82 : vector<8x128xf32>
    %84 = arith.negf %83 : vector<8x128xf32>
    %85 = math.exp %84 : vector<8x128xf32>
    %cst_18 = arith.constant 1.000000e+00 : f32
    %86 = vector.broadcast %cst_18 : f32 to vector<8x128xf32>
    %87 = arith.addf %86, %85 : vector<8x128xf32>
    %88 = arith.divf %86, %87 : vector<8x128xf32>
    %89 = math.tanh %83 : vector<8x128xf32>
    %90 = vector.extract_strided_slice %88 {offsets = [0, 0], sizes = [8, 32], strides = [1, 1]} : vector<8x128xf32> to vector<8x32xf32>
    %91 = vector.extract_strided_slice %88 {offsets = [0, 32], sizes = [8, 32], strides = [1, 1]} : vector<8x128xf32> to vector<8x32xf32>
    %92 = vector.extract_strided_slice %89 {offsets = [0, 64], sizes = [8, 32], strides = [1, 1]} : vector<8x128xf32> to vector<8x32xf32>
    %93 = vector.extract_strided_slice %88 {offsets = [0, 96], sizes = [8, 32], strides = [1, 1]} : vector<8x128xf32> to vector<8x32xf32>
    %94 = arith.mulf %91, %78 : vector<8x32xf32>
    %95 = arith.mulf %90, %92 : vector<8x32xf32>
    %96 = arith.addf %94, %95 : vector<8x32xf32>
    %97 = math.tanh %96 : vector<8x32xf32>
    %98 = arith.mulf %93, %97 : vector<8x32xf32>
    %99 = vector.extract_strided_slice %5 {offsets = [40, 0], sizes = [8, 128], strides = [1, 1]} : vector<64x128xf32> to vector<8x128xf32>
    %cst_19 = arith.constant dense<0.000000e+00> : vector<8x128xf32>
    %100 = tpu.matmul %98, %6, %cst_19 {dimension_numbers = #tpu.dot_dimension_numbers<[1], [0], [0], [1], [0, 0, 1, 1], [], []>} : vector<8x32xf32>, vector<32x128xf32>, vector<8x128xf32> -> vector<8x128xf32>
    %101 = arith.addf %99, %100 : vector<8x128xf32>
    %102 = arith.negf %101 : vector<8x128xf32>
    %103 = math.exp %102 : vector<8x128xf32>
    %cst_20 = arith.constant 1.000000e+00 : f32
    %104 = vector.broadcast %cst_20 : f32 to vector<8x128xf32>
    %105 = arith.addf %104, %103 : vector<8x128xf32>
    %106 = arith.divf %104, %105 : vector<8x128xf32>
    %107 = math.tanh %101 : vector<8x128xf32>
    %108 = vector.extract_strided_slice %106 {offsets = [0, 0], sizes = [8, 32], strides = [1, 1]} : vector<8x128xf32> to vector<8x32xf32>
    %109 = vector.extract_strided_slice %106 {offsets = [0, 32], sizes = [8, 32], strides = [1, 1]} : vector<8x128xf32> to vector<8x32xf32>
    %110 = vector.extract_strided_slice %107 {offsets = [0, 64], sizes = [8, 32], strides = [1, 1]} : vector<8x128xf32> to vector<8x32xf32>
    %111 = vector.extract_strided_slice %106 {offsets = [0, 96], sizes = [8, 32], strides = [1, 1]} : vector<8x128xf32> to vector<8x32xf32>
    %112 = arith.mulf %109, %96 : vector<8x32xf32>
    %113 = arith.mulf %108, %110 : vector<8x32xf32>
    %114 = arith.addf %112, %113 : vector<8x32xf32>
    %115 = math.tanh %114 : vector<8x32xf32>
    %116 = arith.mulf %111, %115 : vector<8x32xf32>
    %117 = vector.extract_strided_slice %5 {offsets = [48, 0], sizes = [8, 128], strides = [1, 1]} : vector<64x128xf32> to vector<8x128xf32>
    %cst_21 = arith.constant dense<0.000000e+00> : vector<8x128xf32>
    %118 = tpu.matmul %116, %6, %cst_21 {dimension_numbers = #tpu.dot_dimension_numbers<[1], [0], [0], [1], [0, 0, 1, 1], [], []>} : vector<8x32xf32>, vector<32x128xf32>, vector<8x128xf32> -> vector<8x128xf32>
    %119 = arith.addf %117, %118 : vector<8x128xf32>
    %120 = arith.negf %119 : vector<8x128xf32>
    %121 = math.exp %120 : vector<8x128xf32>
    %cst_22 = arith.constant 1.000000e+00 : f32
    %122 = vector.broadcast %cst_22 : f32 to vector<8x128xf32>
    %123 = arith.addf %122, %121 : vector<8x128xf32>
    %124 = arith.divf %122, %123 : vector<8x128xf32>
    %125 = math.tanh %119 : vector<8x128xf32>
    %126 = vector.extract_strided_slice %124 {offsets = [0, 0], sizes = [8, 32], strides = [1, 1]} : vector<8x128xf32> to vector<8x32xf32>
    %127 = vector.extract_strided_slice %124 {offsets = [0, 32], sizes = [8, 32], strides = [1, 1]} : vector<8x128xf32> to vector<8x32xf32>
    %128 = vector.extract_strided_slice %125 {offsets = [0, 64], sizes = [8, 32], strides = [1, 1]} : vector<8x128xf32> to vector<8x32xf32>
    %129 = vector.extract_strided_slice %124 {offsets = [0, 96], sizes = [8, 32], strides = [1, 1]} : vector<8x128xf32> to vector<8x32xf32>
    %130 = arith.mulf %127, %114 : vector<8x32xf32>
    %131 = arith.mulf %126, %128 : vector<8x32xf32>
    %132 = arith.addf %130, %131 : vector<8x32xf32>
    %133 = math.tanh %132 : vector<8x32xf32>
    %134 = arith.mulf %129, %133 : vector<8x32xf32>
    %135 = vector.extract_strided_slice %5 {offsets = [56, 0], sizes = [8, 128], strides = [1, 1]} : vector<64x128xf32> to vector<8x128xf32>
    %cst_23 = arith.constant dense<0.000000e+00> : vector<8x128xf32>
    %136 = tpu.matmul %134, %6, %cst_23 {dimension_numbers = #tpu.dot_dimension_numbers<[1], [0], [0], [1], [0, 0, 1, 1], [], []>} : vector<8x32xf32>, vector<32x128xf32>, vector<8x128xf32> -> vector<8x128xf32>
    %137 = arith.addf %135, %136 : vector<8x128xf32>
    %138 = arith.negf %137 : vector<8x128xf32>
    %139 = math.exp %138 : vector<8x128xf32>
    %cst_24 = arith.constant 1.000000e+00 : f32
    %140 = vector.broadcast %cst_24 : f32 to vector<8x128xf32>
    %141 = arith.addf %140, %139 : vector<8x128xf32>
    %142 = arith.divf %140, %141 : vector<8x128xf32>
    %143 = math.tanh %137 : vector<8x128xf32>
    %144 = vector.extract_strided_slice %142 {offsets = [0, 0], sizes = [8, 32], strides = [1, 1]} : vector<8x128xf32> to vector<8x32xf32>
    %145 = vector.extract_strided_slice %142 {offsets = [0, 32], sizes = [8, 32], strides = [1, 1]} : vector<8x128xf32> to vector<8x32xf32>
    %146 = vector.extract_strided_slice %143 {offsets = [0, 64], sizes = [8, 32], strides = [1, 1]} : vector<8x128xf32> to vector<8x32xf32>
    %147 = vector.extract_strided_slice %142 {offsets = [0, 96], sizes = [8, 32], strides = [1, 1]} : vector<8x128xf32> to vector<8x32xf32>
    %148 = arith.mulf %145, %132 : vector<8x32xf32>
    %149 = arith.mulf %144, %146 : vector<8x32xf32>
    %150 = arith.addf %148, %149 : vector<8x32xf32>
    %151 = math.tanh %150 : vector<8x32xf32>
    %152 = arith.mulf %147, %151 : vector<8x32xf32>
    %153 = tpu.concatenate %152, %150 in 1 : vector<8x32xf32>, vector<8x32xf32> -> vector<8x64xf32>
    %c0_25 = arith.constant 0 : index
    %c0_26 = arith.constant 0 : index
    %154 = vector.load %arg4[%c0_25, %c0_26] : memref<8x64xf32, #tpu.memory_space<vmem>>, vector<8x64xf32>
    tpu.vector_store %arg4[%c0_25, %c0_26], %153 {strides = array<i32>} : memref<8x64xf32, #tpu.memory_space<vmem>>, vector<8x64xf32>,
    return
  }
}

</mosaic_0001>

<llo_original>
// kernel: encoder_forward.1
$region0: #{encoder_forward.1}
  #allocation0 [shape = 'u32[]', space=smem, size = 0x4, offset = 0x4, fixed_abs, tag = 'smem constant byte address 0x4 - core index']
  #allocation1 [shape = 'u32[144,128]{1,0:T(1,128)}', space=vmem, size = 0x12000, scoped, tag = 'internal scratch']
  %s0 = inlined_call_operand.vmem [shape: f32[64,8], index: 0, kind: input, shape index: {}]
  %s1 = inlined_call_operand.vmem [shape: f32[8,128], index: 1, kind: input, shape index: {}]
  %s2 = inlined_call_operand.vmem [shape: f32[32,128], index: 2, kind: input, shape index: {}]
  %s3 = inlined_call_operand.vmem [shape: f32[1,128], index: 3, kind: input, shape index: {}]
  %s4 = inlined_call_operand.vmem [shape: f32[8,64], index: 4, kind: output, shape index: {}]
  %s5 = sld [smem:[#allocation0]]
  $region26: #{encoder_forward.1} parent=0
    _
  %s7 = ssub.s32 1, %s5
  %s8 = scalar_select 0, %s7, %s5
  // Predicated region
  $region2: #{encoder_forward.1} parent=0 // pred_check
    _
  $region3: #{encoder_forward.1} parent=0 // pred_check_branch
    %10 = sbr.rel (0) target = $region5
  $region4: #{encoder_forward.1} parent=0 // pred_region
    _
  $region5: #{encoder_forward.1} parent=0 // pred_fallthru
    _
  // Predicated region
  $region6: #{encoder_forward.1} parent=0 // pred_check
    _
  $region7: #{encoder_forward.1} parent=0 // pred_check_branch
    %12 = sbr.rel (0) target = $region9
  $region8: #{encoder_forward.1} parent=0 // pred_region
    _
  $region9: #{encoder_forward.1} parent=0 // pred_fallthru
    _
  // Predicated region
  $region10: #{encoder_forward.1} parent=0 // pred_check
    _
  $region11: #{encoder_forward.1} parent=0 // pred_check_branch
    %14 = sbr.rel (0) target = $region13
  $region12: #{encoder_forward.1} parent=0 // pred_region
    _
  $region13: #{encoder_forward.1} parent=0 // pred_fallthru
    _
  // Predicated region
  $region14: #{encoder_forward.1} parent=0 // pred_check
    _
  $region15: #{encoder_forward.1} parent=0 // pred_check_branch
    %16 = sbr.rel (0) target = $region17
  $region16: #{encoder_forward.1} parent=0 // pred_region
    _
  $region17: #{encoder_forward.1} parent=0 // pred_fallthru
    _
  %v17 = vld [vmem:[%s0] sm:$0xff]
  %v18 = vld [vmem:[%s0 + $0x8] sm:$0xff]
  %v19 = vld [vmem:[%s0 + $0x10] sm:$0xff]
  %v20 = vld [vmem:[%s0 + $0x18] sm:$0xff]
  %v21 = vld [vmem:[%s0 + $0x20] sm:$0xff]
  %v22 = vld [vmem:[%s0 + $0x28] sm:$0xff]
  %v23 = vld [vmem:[%s0 + $0x30] sm:$0xff]
  %v24 = vld [vmem:[%s0 + $0x38] sm:$0xff]
  %v25 = vld [vmem:[%s1] sm:$0xff]
  %v26 = vld [vmem:[%s3] sm:$0x1]
  %v28 = vlaneseq
  %v29 = vshrl.u32 %v28, 7
  %v30 = vsub.s32 0, %v29
  %v31 = vrot.slane %v26, %v30
  %vm33 = vcmask 64512
  %v35 = vsel %vm33, %v17, 0
  %v38 = vsel %vm33, %v18, 0
  %v41 = vsel %vm33, %v19, 0
  %v44 = vsel %vm33, %v20, 0
  %v47 = vsel %vm33, %v21, 0
  %v50 = vsel %vm33, %v22, 0
  %v53 = vsel %vm33, %v23, 0
  %v56 = vsel %vm33, %v24, 0
  %58 = vmatprep.subr.mxu0 0.0
  %59 = vmatpush1.msra.mxu0 %v25
  %60 = vmatprep.subr.mxu0 0.0
  %61 = vmatpush1.msra.mxu0 0.0
  %62 = vmatprep.subr.mxu0 0.0
  %63 = vmatpush1.msra.mxu0 0.0
  %64 = vmatprep.subr.mxu0 0.0
  %65 = vmatpush1.msra.mxu0 0.0
  %66 = vmatprep.subr.mxu0 0.0
  %67 = vmatpush1.msra.mxu0 0.0
  %68 = vmatprep.subr.mxu0 0.0
  %69 = vmatpush1.msra.mxu0 0.0
  %70 = vmatprep.subr.mxu0 0.0
  %71 = vmatpush1.msra.mxu0 0.0
  %72 = vmatprep.subr.mxu0 0.0
  %73 = vmatpush1.msra.mxu0 0.0
  %74 = vmatprep.subr.mxu0 0.0
  %75 = vmatpush1.msra.mxu0 0.0
  %76 = vmatprep.subr.mxu0 0.0
  %77 = vmatpush1.msra.mxu0 0.0
  %78 = vmatprep.subr.mxu0 0.0
  %79 = vmatpush1.msra.mxu0 0.0
  %80 = vmatprep.subr.mxu0 0.0
  %81 = vmatpush1.msra.mxu0 0.0
  %82 = vmatprep.subr.mxu0 0.0
  %83 = vmatpush1.msra.mxu0 0.0
  %84 = vmatprep.subr.mxu0 0.0
  %85 = vmatpush1.msra.mxu0 0.0
  %86 = vmatprep.subr.mxu0 0.0
  %87 = vmatpush1.msra.mxu0 0.0
  %88 = vmatprep.subr.mxu0 0.0
  %89 = vmatpush1.msra.mxu0 0.0
  %90 = vmatprep.subr.mxu0 0.0
  %91 = vmatpush1.msra.mxu0 0.0
  %92 = vmatprep.subr.mxu0 0.0
  %93 = vmatpush1.msra.mxu0 0.0
  %94 = vmatprep.subr.mxu0 0.0
  %95 = vmatpush1.msra.mxu0 0.0
  %96 = vmatprep.subr.mxu0 0.0
  %97 = vmatpush1.msra.mxu0 0.0
  %98 = vmatprep.subr.mxu0 0.0
  %99 = vmatpush1.msra.mxu0 0.0
  %100 = vmatprep.subr.mxu0 0.0
  %101 = vmatpush1.msra.mxu0 0.0
  %102 = vmatprep.subr.mxu0 0.0
  %103 = vmatpush1.msra.mxu0 0.0
  %104 = vmatprep.subr.mxu0 0.0
  %105 = vmatpush1.msra.mxu0 0.0
  %106 = vmatprep.subr.mxu0 0.0
  %107 = vmatpush1.msra.mxu0 0.0
  %108 = vmatprep.subr.mxu0 0.0
  %109 = vmatpush1.msra.mxu0 0.0
  %110 = vmatprep.subr.mxu0 0.0
  %111 = vmatpush1.msra.mxu0 0.0
  %112 = vmatprep.subr.mxu0 0.0
  %113 = vmatpush1.msra.mxu0 0.0
  %114 = vmatprep.subr.mxu0 0.0
  %115 = vmatpush1.msra.mxu0 0.0
  %116 = vmatprep.subr.mxu0 0.0
  %117 = vmatpush1.msra.mxu0 0.0
  %118 = vmatprep.subr.mxu0 0.0
  %119 = vmatpush1.msra.mxu0 0.0
  %120 = vmatprep.subr.mxu0 0.0
  %121 = vmatpush1.msra.mxu0 0.0
  %122 = vmatprep.mubr.f32.mxu0 0.0
  %123 = vmatmul.mubr.f32.gmra.mrb[0].mxu0 %v35
  %v124 = vpop.f32.mrb[0].mxu0
  %v125 = vadd.f32 %v31, %v124
  %v126 = vpop.f32.mrb[0].mxu0
  %127 = vmatprep.mubr.f32.mxu0 0.0
  %128 = vmatmul.mubr.f32.gmra.mrb[0].mxu0 %v38
  %v129 = vpop.f32.mrb[0].mxu0
  %v130 = vadd.f32 %v31, %v129
  %v131 = vpop.f32.mrb[0].mxu0
  %132 = vmatprep.mubr.f32.mxu0 0.0
  %133 = vmatmul.mubr.f32.gmra.mrb[0].mxu0 %v41
  %v134 = vpop.f32.mrb[0].mxu0
  %v135 = vadd.f32 %v31, %v134
  %v136 = vpop.f32.mrb[0].mxu0
  %137 = vmatprep.mubr.f32.mxu0 0.0
  %138 = vmatmul.mubr.f32.gmra.mrb[0].mxu0 %v44
  %v139 = vpop.f32.mrb[0].mxu0
  %v140 = vadd.f32 %v31, %v139
  %v141 = vpop.f32.mrb[0].mxu0
  %142 = vmatprep.mubr.f32.mxu0 0.0
  %143 = vmatmul.mubr.f32.gmra.mrb[0].mxu0 %v47
  %v144 = vpop.f32.mrb[0].mxu0
  %v145 = vadd.f32 %v31, %v144
  %v146 = vpop.f32.mrb[0].mxu0
  %147 = vmatprep.mubr.f32.mxu0 0.0
  %148 = vmatmul.mubr.f32.gmra.mrb[0].mxu0 %v50
  %v149 = vpop.f32.mrb[0].mxu0
  %v150 = vadd.f32 %v31, %v149
  %v151 = vpop.f32.mrb[0].mxu0
  %152 = vmatprep.mubr.f32.mxu0 0.0
  %153 = vmatmul.mubr.f32.gmra.mrb[0].mxu0 %v53
  %v154 = vpop.f32.mrb[0].mxu0
  %v155 = vadd.f32 %v31, %v154
  %v156 = vpop.f32.mrb[0].mxu0
  %157 = vmatprep.mubr.f32.mxu0 0.0
  %158 = vmatmul.mubr.f32.gmra.mrb[0].mxu0 %v56
  %v159 = vpop.f32.mrb[0].mxu0
  %v160 = vadd.f32 %v31, %v159
  %v161 = vpop.f32.mrb[0].mxu0
  %162 = vdwg.mxu0
  %v163 = vld [vmem:[%s2] sm:$0xff]
  %v164 = vld [vmem:[%s2 + $0x8] sm:$0xff]
  %v165 = vld [vmem:[%s2 + $0x10] sm:$0xff]
  %v166 = vld [vmem:[%s2 + $0x18] sm:$0xff]
  %vm167 = vcmask 261120
  %v169 = vsel %vm167, 0.0, 0
  %171 = vmatprep.subr.mxu0 0.0
  %172 = vmatpush1.msra.mxu0 %v163
  %173 = vmatprep.subr.mxu0 0.0
  %174 = vmatpush1.msra.mxu0 %v164
  %175 = vmatprep.subr.mxu0 0.0
  %176 = vmatpush1.msra.mxu0 %v165
  %177 = vmatprep.subr.mxu0 0.0
  %178 = vmatpush1.msra.mxu0 %v166
  %179 = vmatprep.subr.mxu0 0.0
  %180 = vmatpush1.msra.mxu0 0.0
  %181 = vmatprep.subr.mxu0 0.0
  %182 = vmatpush1.msra.mxu0 0.0
  %183 = vmatprep.subr.mxu0 0.0
  %184 = vmatpush1.msra.mxu0 0.0
  %185 = vmatprep.subr.mxu0 0.0
  %186 = vmatpush1.msra.mxu0 0.0
  %187 = vmatprep.subr.mxu0 0.0
  %188 = vmatpush1.msra.mxu0 0.0
  %189 = vmatprep.subr.mxu0 0.0
  %190 = vmatpush1.msra.mxu0 0.0
  %191 = vmatprep.subr.mxu0 0.0
  %192 = vmatpush1.msra.mxu0 0.0
  %193 = vmatprep.subr.mxu0 0.0
  %194 = vmatpush1.msra.mxu0 0.0
  %195 = vmatprep.subr.mxu0 0.0
  %196 = vmatpush1.msra.mxu0 0.0
  %197 = vmatprep.subr.mxu0 0.0
  %198 = vmatpush1.msra.mxu0 0.0
  %199 = vmatprep.subr.mxu0 0.0
  %200 = vmatpush1.msra.mxu0 0.0
  %201 = vmatprep.subr.mxu0 0.0
  %202 = vmatpush1.msra.mxu0 0.0
  %203 = vmatprep.subr.mxu0 0.0
  %204 = vmatpush1.msra.mxu0 0.0
  %205 = vmatprep.subr.mxu0 0.0
  %206 = vmatpush1.msra.mxu0 0.0
  %207 = vmatprep.subr.mxu0 0.0
  %208 = vmatpush1.msra.mxu0 0.0
  %209 = vmatprep.subr.mxu0 0.0
  %210 = vmatpush1.msra.mxu0 0.0
  %211 = vmatprep.subr.mxu0 0.0
  %212 = vmatpush1.msra.mxu0 0.0
  %213 = vmatprep.subr.mxu0 0.0
  %214 = vmatpush1.msra.mxu0 0.0
  %215 = vmatprep.subr.mxu0 0.0
  %216 = vmatpush1.msra.mxu0 0.0
  %217 = vmatprep.subr.mxu0 0.0
  %218 = vmatpush1.msra.mxu0 0.0
  %219 = vmatprep.subr.mxu0 0.0
  %220 = vmatpush1.msra.mxu0 0.0
  %221 = vmatprep.subr.mxu0 0.0
  %222 = vmatpush1.msra.mxu0 0.0
  %223 = vmatprep.subr.mxu0 0.0
  %224 = vmatpush1.msra.mxu0 0.0
  %225 = vmatprep.subr.mxu0 0.0
  %226 = vmatpush1.msra.mxu0 0.0
  %227 = vmatprep.subr.mxu0 0.0
  %228 = vmatpush1.msra.mxu0 0.0
  %229 = vmatprep.subr.mxu0 0.0
  %230 = vmatpush1.msra.mxu0 0.0
  %231 = vmatprep.subr.mxu0 0.0
  %232 = vmatpush1.msra.mxu0 0.0
  %233 = vmatprep.subr.mxu0 0.0
  %234 = vmatpush1.msra.mxu0 0.0
  %235 = vmatprep.mubr.f32.mxu0 0.0
  %236 = vmatmul.mubr.f32.gmra.mrb[0].mxu0 %v169
  %v237 = vpop.f32.mrb[0].mxu0
  %v238 = vadd.f32 0.0, %v237
  %v239 = vpop.f32.mrb[0].mxu0
  %240 = vdwg.mxu0
  %v241 = vadd.f32 %v125, %v238
  %v242 = vxor.u32 %v241, 2147483648
  %v243 = vmul.f32 %v242, 1.442695
  %v244 = vpow.pop %v243
  %v245 = vadd.f32 %v244, 1.0
  %v246 = vrcp.pop %v245
  %v247 = vmul.f32 1.0, %v246
  %v248 = vtanh.pop %v241
  %v249 = vmul.f32 %v247, 0.0
  %251 = vrot.lane.b32.xlu0 %v248, 64
  %v252 = vpop.permute.xlu0 %251
  %v254 = vmul.f32 %v247, %v252
  %256 = vrot.lane.b32.xlu0 %v254, 32
  %v257 = vpop.permute.xlu0 %256
  %v259 = vadd.f32 %v249, %v257
  %v260 = vtanh.pop %v259
  %262 = vrot.lane.b32.xlu0 %v260, 64
  %v263 = vpop.permute.xlu0 %262
  %v265 = vmul.f32 %v247, %v263
  %267 = vrot.lane.b32.xlu0 %v265, 32
  %v268 = vpop.permute.xlu0 %267
  %v269 = vsel %vm167, %v268, 0
  %271 = vmatprep.subr.mxu0 0.0
  %272 = vmatpush1.msra.mxu0 %v163
  %273 = vmatprep.subr.mxu0 0.0
  %274 = vmatpush1.msra.mxu0 %v164
  %275 = vmatprep.subr.mxu0 0.0
  %276 = vmatpush1.msra.mxu0 %v165
  %277 = vmatprep.subr.mxu0 0.0
  %278 = vmatpush1.msra.mxu0 %v166
  %279 = vmatprep.subr.mxu0 0.0
  %280 = vmatpush1.msra.mxu0 0.0
  %281 = vmatprep.subr.mxu0 0.0
  %282 = vmatpush1.msra.mxu0 0.0
  %283 = vmatprep.subr.mxu0 0.0
  %284 = vmatpush1.msra.mxu0 0.0
  %285 = vmatprep.subr.mxu0 0.0
  %286 = vmatpush1.msra.mxu0 0.0
  %287 = vmatprep.subr.mxu0 0.0
  %288 = vmatpush1.msra.mxu0 0.0
  %289 = vmatprep.subr.mxu0 0.0
  %290 = vmatpush1.msra.mxu0 0.0
  %291 = vmatprep.subr.mxu0 0.0
  %292 = vmatpush1.msra.mxu0 0.0
  %293 = vmatprep.subr.mxu0 0.0
  %294 = vmatpush1.msra.mxu0 0.0
  %295 = vmatprep.subr.mxu0 0.0
  %296 = vmatpush1.msra.mxu0 0.0
  %297 = vmatprep.subr.mxu0 0.0
  %298 = vmatpush1.msra.mxu0 0.0
  %299 = vmatprep.subr.mxu0 0.0
  %300 = vmatpush1.msra.mxu0 0.0
  %301 = vmatprep.subr.mxu0 0.0
  %302 = vmatpush1.msra.mxu0 0.0
  %303 = vmatprep.subr.mxu0 0.0
  %304 = vmatpush1.msra.mxu0 0.0
  %305 = vmatprep.subr.mxu0 0.0
  %306 = vmatpush1.msra.mxu0 0.0
  %307 = vmatprep.subr.mxu0 0.0
  %308 = vmatpush1.msra.mxu0 0.0
  %309 = vmatprep.subr.mxu0 0.0
  %310 = vmatpush1.msra.mxu0 0.0
  %311 = vmatprep.subr.mxu0 0.0
  %312 = vmatpush1.msra.mxu0 0.0
  %313 = vmatprep.subr.mxu0 0.0
  %314 = vmatpush1.msra.mxu0 0.0
  %315 = vmatprep.subr.mxu0 0.0
  %316 = vmatpush1.msra.mxu0 0.0
  %317 = vmatprep.subr.mxu0 0.0
  %318 = vmatpush1.msra.mxu0 0.0
  %319 = vmatprep.subr.mxu0 0.0
  %320 = vmatpush1.msra.mxu0 0.0
  %321 = vmatprep.subr.mxu0 0.0
  %322 = vmatpush1.msra.mxu0 0.0
  %323 = vmatprep.subr.mxu0 0.0
  %324 = vmatpush1.msra.mxu0 0.0
  %325 = vmatprep.subr.mxu0 0.0
  %326 = vmatpush1.msra.mxu0 0.0
  %327 = vmatprep.subr.mxu0 0.0
  %328 = vmatpush1.msra.mxu0 0.0
  %329 = vmatprep.subr.mxu0 0.0
  %330 = vmatpush1.msra.mxu0 0.0
  %331 = vmatprep.subr.mxu0 0.0
  %332 = vmatpush1.msra.mxu0 0.0
  %333 = vmatprep.subr.mxu0 0.0
  %334 = vmatpush1.msra.mxu0 0.0
  %335 = vmatprep.mubr.f32.mxu0 0.0
  %336 = vmatmul.mubr.f32.gmra.mrb[0].mxu0 %v269
  %v337 = vpop.f32.mrb[0].mxu0
  %v338 = vadd.f32 0.0, %v337
  %v339 = vpop.f32.mrb[0].mxu0
  %340 = vdwg.mxu0
  %v341 = vadd.f32 %v130, %v338
  %v342 = vxor.u32 %v341, 2147483648
  %v343 = vmul.f32 %v342, 1.442695
  %v344 = vpow.pop %v343
  %v345 = vadd.f32 %v344, 1.0
  %v346 = vrcp.pop %v345
  %v347 = vmul.f32 1.0, %v346
  %v348 = vtanh.pop %v341
  %v349 = vmul.f32 %v347, %v259
  %351 = vrot.lane.b32.xlu0 %v348, 64
  %v352 = vpop.permute.xlu0 %351
  %v354 = vmul.f32 %v347, %v352
  %356 = vrot.lane.b32.xlu0 %v354, 32
  %v357 = vpop.permute.xlu0 %356
  %v359 = vadd.f32 %v349, %v357
  %v360 = vtanh.pop %v359
  %362 = vrot.lane.b32.xlu0 %v360, 64
  %v363 = vpop.permute.xlu0 %362
  %v365 = vmul.f32 %v347, %v363
  %367 = vrot.lane.b32.xlu0 %v365, 32
  %v368 = vpop.permute.xlu0 %367
  %v369 = vsel %vm167, %v368, 0
  %371 = vmatprep.subr.mxu0 0.0
  %372 = vmatpush1.msra.mxu0 %v163
  %373 = vmatprep.subr.mxu0 0.0
  %374 = vmatpush1.msra.mxu0 %v164
  %375 = vmatprep.subr.mxu0 0.0
  %376 = vmatpush1.msra.mxu0 %v165
  %377 = vmatprep.subr.mxu0 0.0
  %378 = vmatpush1.msra.mxu0 %v166
  %379 = vmatprep.subr.mxu0 0.0
  %380 = vmatpush1.msra.mxu0 0.0
  %381 = vmatprep.subr.mxu0 0.0
  %382 = vmatpush1.msra.mxu0 0.0
  %383 = vmatprep.subr.mxu0 0.0
  %384 = vmatpush1.msra.mxu0 0.0
  %385 = vmatprep.subr.mxu0 0.0
  %386 = vmatpush1.msra.mxu0 0.0
  %387 = vmatprep.subr.mxu0 0.0
  %388 = vmatpush1.msra.mxu0 0.0
  %389 = vmatprep.subr.mxu0 0.0
  %390 = vmatpush1.msra.mxu0 0.0
  %391 = vmatprep.subr.mxu0 0.0
  %392 = vmatpush1.msra.mxu0 0.0
  %393 = vmatprep.subr.mxu0 0.0
  %394 = vmatpush1.msra.mxu0 0.0
  %395 = vmatprep.subr.mxu0 0.0
  %396 = vmatpush1.msra.mxu0 0.0
  %397 = vmatprep.subr.mxu0 0.0
  %398 = vmatpush1.msra.mxu0 0.0
  %399 = vmatprep.subr.mxu0 0.0
  %400 = vmatpush1.msra.mxu0 0.0
  %401 = vmatprep.subr.mxu0 0.0
  %402 = vmatpush1.msra.mxu0 0.0
  %403 = vmatprep.subr.mxu0 0.0
  %404 = vmatpush1.msra.mxu0 0.0
  %405 = vmatprep.subr.mxu0 0.0
  %406 = vmatpush1.msra.mxu0 0.0
  %407 = vmatprep.subr.mxu0 0.0
  %408 = vmatpush1.msra.mxu0 0.0
  %409 = vmatprep.subr.mxu0 0.0
  %410 = vmatpush1.msra.mxu0 0.0
  %411 = vmatprep.subr.mxu0 0.0
  %412 = vmatpush1.msra.mxu0 0.0
  %413 = vmatprep.subr.mxu0 0.0
  %414 = vmatpush1.msra.mxu0 0.0
  %415 = vmatprep.subr.mxu0 0.0
  %416 = vmatpush1.msra.mxu0 0.0
  %417 = vmatprep.subr.mxu0 0.0
  %418 = vmatpush1.msra.mxu0 0.0
  %419 = vmatprep.subr.mxu0 0.0
  %420 = vmatpush1.msra.mxu0 0.0
  %421 = vmatprep.subr.mxu0 0.0
  %422 = vmatpush1.msra.mxu0 0.0
  %423 = vmatprep.subr.mxu0 0.0
  %424 = vmatpush1.msra.mxu0 0.0
  %425 = vmatprep.subr.mxu0 0.0
  %426 = vmatpush1.msra.mxu0 0.0
  %427 = vmatprep.subr.mxu0 0.0
  %428 = vmatpush1.msra.mxu0 0.0
  %429 = vmatprep.subr.mxu0 0.0
  %430 = vmatpush1.msra.mxu0 0.0
  %431 = vmatprep.subr.mxu0 0.0
  %432 = vmatpush1.msra.mxu0 0.0
  %433 = vmatprep.subr.mxu0 0.0
  %434 = vmatpush1.msra.mxu0 0.0
  %435 = vmatprep.mubr.f32.mxu0 0.0
  %436 = vmatmul.mubr.f32.gmra.mrb[0].mxu0 %v369
  %v437 = vpop.f32.mrb[0].mxu0
  %v438 = vadd.f32 0.0, %v437
  %v439 = vpop.f32.mrb[0].mxu0
  %440 = vdwg.mxu0
  %v441 = vadd.f32 %v135, %v438
  %v442 = vxor.u32 %v441, 2147483648
  %v443 = vmul.f32 %v442, 1.442695
  %v444 = vpow.pop %v443
  %v445 = vadd.f32 %v444, 1.0
  %v446 = vrcp.pop %v445
  %v447 = vmul.f32 1.0, %v446
  %v448 = vtanh.pop %v441
  %v449 = vmul.f32 %v447, %v359
  %451 = vrot.lane.b32.xlu0 %v448, 64
  %v452 = vpop.permute.xlu0 %451
  %v454 = vmul.f32 %v447, %v452
  %456 = vrot.lane.b32.xlu0 %v454, 32
  %v457 = vpop.permute.xlu0 %456
  %v459 = vadd.f32 %v449, %v457
  %v460 = vtanh.pop %v459
  %462 = vrot.lane.b32.xlu0 %v460, 64
  %v463 = vpop.permute.xlu0 %462
  %v465 = vmul.f32 %v447, %v463
  %467 = vrot.lane.b32.xlu0 %v465, 32
  %v468 = vpop.permute.xlu0 %467
  %v469 = vsel %vm167, %v468, 0
  %471 = vmatprep.subr.mxu0 0.0
  %472 = vmatpush1.msra.mxu0 %v163
  %473 = vmatprep.subr.mxu0 0.0
  %474 = vmatpush1.msra.mxu0 %v164
  %475 = vmatprep.subr.mxu0 0.0
  %476 = vmatpush1.msra.mxu0 %v165
  %477 = vmatprep.subr.mxu0 0.0
  %478 = vmatpush1.msra.mxu0 %v166
  %479 = vmatprep.subr.mxu0 0.0
  %480 = vmatpush1.msra.mxu0 0.0
  %481 = vmatprep.subr.mxu0 0.0
  %482 = vmatpush1.msra.mxu0 0.0
  %483 = vmatprep.subr.mxu0 0.0
  %484 = vmatpush1.msra.mxu0 0.0
  %485 = vmatprep.subr.mxu0 0.0
  %486 = vmatpush1.msra.mxu0 0.0
  %487 = vmatprep.subr.mxu0 0.0
  %488 = vmatpush1.msra.mxu0 0.0
  %489 = vmatprep.subr.mxu0 0.0
  %490 = vmatpush1.msra.mxu0 0.0
  %491 = vmatprep.subr.mxu0 0.0
  %492 = vmatpush1.msra.mxu0 0.0
  %493 = vmatprep.subr.mxu0 0.0
  %494 = vmatpush1.msra.mxu0 0.0
  %495 = vmatprep.subr.mxu0 0.0
  %496 = vmatpush1.msra.mxu0 0.0
  %497 = vmatprep.subr.mxu0 0.0
  %498 = vmatpush1.msra.mxu0 0.0
  %499 = vmatprep.subr.mxu0 0.0
  %500 = vmatpush1.msra.mxu0 0.0
  %501 = vmatprep.subr.mxu0 0.0
  %502 = vmatpush1.msra.mxu0 0.0
  %503 = vmatprep.subr.mxu0 0.0
  %504 = vmatpush1.msra.mxu0 0.0
  %505 = vmatprep.subr.mxu0 0.0
  %506 = vmatpush1.msra.mxu0 0.0
  %507 = vmatprep.subr.mxu0 0.0
  %508 = vmatpush1.msra.mxu0 0.0
  %509 = vmatprep.subr.mxu0 0.0
  %510 = vmatpush1.msra.mxu0 0.0
  %511 = vmatprep.subr.mxu0 0.0
  %512 = vmatpush1.msra.mxu0 0.0
  %513 = vmatprep.subr.mxu0 0.0
  %514 = vmatpush1.msra.mxu0 0.0
  %515 = vmatprep.subr.mxu0 0.0
  %516 = vmatpush1.msra.mxu0 0.0
  %517 = vmatprep.subr.mxu0 0.0
  %518 = vmatpush1.msra.mxu0 0.0
  %519 = vmatprep.subr.mxu0 0.0
  %520 = vmatpush1.msra.mxu0 0.0
  %521 = vmatprep.subr.mxu0 0.0
  %522 = vmatpush1.msra.mxu0 0.0
  %523 = vmatprep.subr.mxu0 0.0
  %524 = vmatpush1.msra.mxu0 0.0
  %525 = vmatprep.subr.mxu0 0.0
  %526 = vmatpush1.msra.mxu0 0.0
  %527 = vmatprep.subr.mxu0 0.0
  %528 = vmatpush1.msra.mxu0 0.0
  %529 = vmatprep.subr.mxu0 0.0
  %530 = vmatpush1.msra.mxu0 0.0
  %531 = vmatprep.subr.mxu0 0.0
  %532 = vmatpush1.msra.mxu0 0.0
  %533 = vmatprep.subr.mxu0 0.0
  %534 = vmatpush1.msra.mxu0 0.0
  %535 = vmatprep.mubr.f32.mxu0 0.0
  %536 = vmatmul.mubr.f32.gmra.mrb[0].mxu0 %v469
  %v537 = vpop.f32.mrb[0].mxu0
  %v538 = vadd.f32 0.0, %v537
  %v539 = vpop.f32.mrb[0].mxu0
  %540 = vdwg.mxu0
  %v541 = vadd.f32 %v140, %v538
  %v542 = vxor.u32 %v541, 2147483648
  %v543 = vmul.f32 %v542, 1.442695
  %v544 = vpow.pop %v543
  %v545 = vadd.f32 %v544, 1.0
  %v546 = vrcp.pop %v545
  %v547 = vmul.f32 1.0, %v546
  %v548 = vtanh.pop %v541
  %v549 = vmul.f32 %v547, %v459
  %551 = vrot.lane.b32.xlu0 %v548, 64
  %v552 = vpop.permute.xlu0 %551
  %v554 = vmul.f32 %v547, %v552
  %556 = vrot.lane.b32.xlu0 %v554, 32
  %v557 = vpop.permute.xlu0 %556
  %v559 = vadd.f32 %v549, %v557
  %v560 = vtanh.pop %v559
  %562 = vrot.lane.b32.xlu0 %v560, 64
  %v563 = vpop.permute.xlu0 %562
  %v565 = vmul.f32 %v547, %v563
  %567 = vrot.lane.b32.xlu0 %v565, 32
  %v568 = vpop.permute.xlu0 %567
  %v569 = vsel %vm167, %v568, 0
  %571 = vmatprep.subr.mxu0 0.0
  %572 = vmatpush1.msra.mxu0 %v163
  %573 = vmatprep.subr.mxu0 0.0
  %574 = vmatpush1.msra.mxu0 %v164
  %575 = vmatprep.subr.mxu0 0.0
  %576 = vmatpush1.msra.mxu0 %v165
  %577 = vmatprep.subr.mxu0 0.0
  %578 = vmatpush1.msra.mxu0 %v166
  %579 = vmatprep.subr.mxu0 0.0
  %580 = vmatpush1.msra.mxu0 0.0
  %581 = vmatprep.subr.mxu0 0.0
  %582 = vmatpush1.msra.mxu0 0.0
  %583 = vmatprep.subr.mxu0 0.0
  %584 = vmatpush1.msra.mxu0 0.0
  %585 = vmatprep.subr.mxu0 0.0
  %586 = vmatpush1.msra.mxu0 0.0
  %587 = vmatprep.subr.mxu0 0.0
  %588 = vmatpush1.msra.mxu0 0.0
  %589 = vmatprep.subr.mxu0 0.0
  %590 = vmatpush1.msra.mxu0 0.0
  %591 = vmatprep.subr.mxu0 0.0
  %592 = vmatpush1.msra.mxu0 0.0
  %593 = vmatprep.subr.mxu0 0.0
  %594 = vmatpush1.msra.mxu0 0.0
  %595 = vmatprep.subr.mxu0 0.0
  %596 = vmatpush1.msra.mxu0 0.0
  %597 = vmatprep.subr.mxu0 0.0
  %598 = vmatpush1.msra.mxu0 0.0
  %599 = vmatprep.subr.mxu0 0.0
  %600 = vmatpush1.msra.mxu0 0.0
  %601 = vmatprep.subr.mxu0 0.0
  %602 = vmatpush1.msra.mxu0 0.0
  %603 = vmatprep.subr.mxu0 0.0
  %604 = vmatpush1.msra.mxu0 0.0
  %605 = vmatprep.subr.mxu0 0.0
  %606 = vmatpush1.msra.mxu0 0.0
  %607 = vmatprep.subr.mxu0 0.0
  %608 = vmatpush1.msra.mxu0 0.0
  %609 = vmatprep.subr.mxu0 0.0
  %610 = vmatpush1.msra.mxu0 0.0
  %611 = vmatprep.subr.mxu0 0.0
  %612 = vmatpush1.msra.mxu0 0.0
  %613 = vmatprep.subr.mxu0 0.0
  %614 = vmatpush1.msra.mxu0 0.0
  %615 = vmatprep.subr.mxu0 0.0
  %616 = vmatpush1.msra.mxu0 0.0
  %617 = vmatprep.subr.mxu0 0.0
  %618 = vmatpush1.msra.mxu0 0.0
  %619 = vmatprep.subr.mxu0 0.0
  %620 = vmatpush1.msra.mxu0 0.0
  %621 = vmatprep.subr.mxu0 0.0
  %622 = vmatpush1.msra.mxu0 0.0
  %623 = vmatprep.subr.mxu0 0.0
  %624 = vmatpush1.msra.mxu0 0.0
  %625 = vmatprep.subr.mxu0 0.0
  %626 = vmatpush1.msra.mxu0 0.0
  %627 = vmatprep.subr.mxu0 0.0
  %628 = vmatpush1.msra.mxu0 0.0
  %629 = vmatprep.subr.mxu0 0.0
  %630 = vmatpush1.msra.mxu0 0.0
  %631 = vmatprep.subr.mxu0 0.0
  %632 = vmatpush1.msra.mxu0 0.0
  %633 = vmatprep.subr.mxu0 0.0
  %634 = vmatpush1.msra.mxu0 0.0
  %635 = vmatprep.mubr.f32.mxu0 0.0
  %636 = vmatmul.mubr.f32.gmra.mrb[0].mxu0 %v569
  %v637 = vpop.f32.mrb[0].mxu0
  %v638 = vadd.f32 0.0, %v637
  %v639 = vpop.f32.mrb[0].mxu0
  %640 = vdwg.mxu0
  %v641 = vadd.f32 %v145, %v638
  %v642 = vxor.u32 %v641, 2147483648
  %v643 = vmul.f32 %v642, 1.442695
  %v644 = vpow.pop %v643
  %v645 = vadd.f32 %v644, 1.0
  %v646 = vrcp.pop %v645
  %v647 = vmul.f32 1.0, %v646
  %v648 = vtanh.pop %v641
  %v649 = vmul.f32 %v647, %v559
  %651 = vrot.lane.b32.xlu0 %v648, 64
  %v652 = vpop.permute.xlu0 %651
  %v654 = vmul.f32 %v647, %v652
  %656 = vrot.lane.b32.xlu0 %v654, 32
  %v657 = vpop.permute.xlu0 %656
  %v659 = vadd.f32 %v649, %v657
  %v660 = vtanh.pop %v659
  %662 = vrot.lane.b32.xlu0 %v660, 64
  %v663 = vpop.permute.xlu0 %662
  %v665 = vmul.f32 %v647, %v663
  %667 = vrot.lane.b32.xlu0 %v665, 32
  %v668 = vpop.permute.xlu0 %667
  %v669 = vsel %vm167, %v668, 0
  %671 = vmatprep.subr.mxu0 0.0
  %672 = vmatpush1.msra.mxu0 %v163
  %673 = vmatprep.subr.mxu0 0.0
  %674 = vmatpush1.msra.mxu0 %v164
  %675 = vmatprep.subr.mxu0 0.0
  %676 = vmatpush1.msra.mxu0 %v165
  %677 = vmatprep.subr.mxu0 0.0
  %678 = vmatpush1.msra.mxu0 %v166
  %679 = vmatprep.subr.mxu0 0.0
  %680 = vmatpush1.msra.mxu0 0.0
  %681 = vmatprep.subr.mxu0 0.0
  %682 = vmatpush1.msra.mxu0 0.0
  %683 = vmatprep.subr.mxu0 0.0
  %684 = vmatpush1.msra.mxu0 0.0
  %685 = vmatprep.subr.mxu0 0.0
  %686 = vmatpush1.msra.mxu0 0.0
  %687 = vmatprep.subr.mxu0 0.0
  %688 = vmatpush1.msra.mxu0 0.0
  %689 = vmatprep.subr.mxu0 0.0
  %690 = vmatpush1.msra.mxu0 0.0
  %691 = vmatprep.subr.mxu0 0.0
  %692 = vmatpush1.msra.mxu0 0.0
  %693 = vmatprep.subr.mxu0 0.0
  %694 = vmatpush1.msra.mxu0 0.0
  %695 = vmatprep.subr.mxu0 0.0
  %696 = vmatpush1.msra.mxu0 0.0
  %697 = vmatprep.subr.mxu0 0.0
  %698 = vmatpush1.msra.mxu0 0.0
  %699 = vmatprep.subr.mxu0 0.0
  %700 = vmatpush1.msra.mxu0 0.0
  %701 = vmatprep.subr.mxu0 0.0
  %702 = vmatpush1.msra.mxu0 0.0
  %703 = vmatprep.subr.mxu0 0.0
  %704 = vmatpush1.msra.mxu0 0.0
  %705 = vmatprep.subr.mxu0 0.0
  %706 = vmatpush1.msra.mxu0 0.0
  %707 = vmatprep.subr.mxu0 0.0
  %708 = vmatpush1.msra.mxu0 0.0
  %709 = vmatprep.subr.mxu0 0.0
  %710 = vmatpush1.msra.mxu0 0.0
  %711 = vmatprep.subr.mxu0 0.0
  %712 = vmatpush1.msra.mxu0 0.0
  %713 = vmatprep.subr.mxu0 0.0
  %714 = vmatpush1.msra.mxu0 0.0
  %715 = vmatprep.subr.mxu0 0.0
  %716 = vmatpush1.msra.mxu0 0.0
  %717 = vmatprep.subr.mxu0 0.0
  %718 = vmatpush1.msra.mxu0 0.0
  %719 = vmatprep.subr.mxu0 0.0
  %720 = vmatpush1.msra.mxu0 0.0
  %721 = vmatprep.subr.mxu0 0.0
  %722 = vmatpush1.msra.mxu0 0.0
  %723 = vmatprep.subr.mxu0 0.0
  %724 = vmatpush1.msra.mxu0 0.0
  %725 = vmatprep.subr.mxu0 0.0
  %726 = vmatpush1.msra.mxu0 0.0
  %727 = vmatprep.subr.mxu0 0.0
  %728 = vmatpush1.msra.mxu0 0.0
  %729 = vmatprep.subr.mxu0 0.0
  %730 = vmatpush1.msra.mxu0 0.0
  %731 = vmatprep.subr.mxu0 0.0
  %732 = vmatpush1.msra.mxu0 0.0
  %733 = vmatprep.subr.mxu0 0.0
  %734 = vmatpush1.msra.mxu0 0.0
  %735 = vmatprep.mubr.f32.mxu0 0.0
  %736 = vmatmul.mubr.f32.gmra.mrb[0].mxu0 %v669
  %v737 = vpop.f32.mrb[0].mxu0
  %v738 = vadd.f32 0.0, %v737
  %v739 = vpop.f32.mrb[0].mxu0
  %740 = vdwg.mxu0
  %v741 = vadd.f32 %v150, %v738
  %v742 = vxor.u32 %v741, 2147483648
  %v743 = vmul.f32 %v742, 1.442695
  %v744 = vpow.pop %v743
  %v745 = vadd.f32 %v744, 1.0
  %v746 = vrcp.pop %v745
  %v747 = vmul.f32 1.0, %v746
  %v748 = vtanh.pop %v741
  %v749 = vmul.f32 %v747, %v659
  %751 = vrot.lane.b32.xlu0 %v748, 64
  %v752 = vpop.permute.xlu0 %751
  %v754 = vmul.f32 %v747, %v752
  %756 = vrot.lane.b32.xlu0 %v754, 32
  %v757 = vpop.permute.xlu0 %756
  %v759 = vadd.f32 %v749, %v757
  %v760 = vtanh.pop %v759
  %762 = vrot.lane.b32.xlu0 %v760, 64
  %v763 = vpop.permute.xlu0 %762
  %v765 = vmul.f32 %v747, %v763
  %767 = vrot.lane.b32.xlu0 %v765, 32
  %v768 = vpop.permute.xlu0 %767
  %v769 = vsel %vm167, %v768, 0
  %771 = vmatprep.subr.mxu0 0.0
  %772 = vmatpush1.msra.mxu0 %v163
  %773 = vmatprep.subr.mxu0 0.0
  %774 = vmatpush1.msra.mxu0 %v164
  %775 = vmatprep.subr.mxu0 0.0
  %776 = vmatpush1.msra.mxu0 %v165
  %777 = vmatprep.subr.mxu0 0.0
  %778 = vmatpush1.msra.mxu0 %v166
  %779 = vmatprep.subr.mxu0 0.0
  %780 = vmatpush1.msra.mxu0 0.0
  %781 = vmatprep.subr.mxu0 0.0
  %782 = vmatpush1.msra.mxu0 0.0
  %783 = vmatprep.subr.mxu0 0.0
  %784 = vmatpush1.msra.mxu0 0.0
  %785 = vmatprep.subr.mxu0 0.0
  %786 = vmatpush1.msra.mxu0 0.0
  %787 = vmatprep.subr.mxu0 0.0
  %788 = vmatpush1.msra.mxu0 0.0
  %789 = vmatprep.subr.mxu0 0.0
  %790 = vmatpush1.msra.mxu0 0.0
  %791 = vmatprep.subr.mxu0 0.0
  %792 = vmatpush1.msra.mxu0 0.0
  %793 = vmatprep.subr.mxu0 0.0
  %794 = vmatpush1.msra.mxu0 0.0
  %795 = vmatprep.subr.mxu0 0.0
  %796 = vmatpush1.msra.mxu0 0.0
  %797 = vmatprep.subr.mxu0 0.0
  %798 = vmatpush1.msra.mxu0 0.0
  %799 = vmatprep.subr.mxu0 0.0
  %800 = vmatpush1.msra.mxu0 0.0
  %801 = vmatprep.subr.mxu0 0.0
  %802 = vmatpush1.msra.mxu0 0.0
  %803 = vmatprep.subr.mxu0 0.0
  %804 = vmatpush1.msra.mxu0 0.0
  %805 = vmatprep.subr.mxu0 0.0
  %806 = vmatpush1.msra.mxu0 0.0
  %807 = vmatprep.subr.mxu0 0.0
  %808 = vmatpush1.msra.mxu0 0.0
  %809 = vmatprep.subr.mxu0 0.0
  %810 = vmatpush1.msra.mxu0 0.0
  %811 = vmatprep.subr.mxu0 0.0
  %812 = vmatpush1.msra.mxu0 0.0
  %813 = vmatprep.subr.mxu0 0.0
  %814 = vmatpush1.msra.mxu0 0.0
  %815 = vmatprep.subr.mxu0 0.0
  %816 = vmatpush1.msra.mxu0 0.0
  %817 = vmatprep.subr.mxu0 0.0
  %818 = vmatpush1.msra.mxu0 0.0
  %819 = vmatprep.subr.mxu0 0.0
  %820 = vmatpush1.msra.mxu0 0.0
  %821 = vmatprep.subr.mxu0 0.0
  %822 = vmatpush1.msra.mxu0 0.0
  %823 = vmatprep.subr.mxu0 0.0
  %824 = vmatpush1.msra.mxu0 0.0
  %825 = vmatprep.subr.mxu0 0.0
  %826 = vmatpush1.msra.mxu0 0.0
  %827 = vmatprep.subr.mxu0 0.0
  %828 = vmatpush1.msra.mxu0 0.0
  %829 = vmatprep.subr.mxu0 0.0
  %830 = vmatpush1.msra.mxu0 0.0
  %831 = vmatprep.subr.mxu0 0.0
  %832 = vmatpush1.msra.mxu0 0.0
  %833 = vmatprep.subr.mxu0 0.0
  %834 = vmatpush1.msra.mxu0 0.0
  %835 = vmatprep.mubr.f32.mxu0 0.0
  %836 = vmatmul.mubr.f32.gmra.mrb[0].mxu0 %v769
  %v837 = vpop.f32.mrb[0].mxu0
  %v838 = vadd.f32 0.0, %v837
  %v839 = vpop.f32.mrb[0].mxu0
  %840 = vdwg.mxu0
  %v841 = vadd.f32 %v155, %v838
  %v842 = vxor.u32 %v841, 2147483648
  %v843 = vmul.f32 %v842, 1.442695
  %v844 = vpow.pop %v843
  %v845 = vadd.f32 %v844, 1.0
  %v846 = vrcp.pop %v845
  %v847 = vmul.f32 1.0, %v846
  %v848 = vtanh.pop %v841
  %v849 = vmul.f32 %v847, %v759
  %851 = vrot.lane.b32.xlu0 %v848, 64
  %v852 = vpop.permute.xlu0 %851
  %v854 = vmul.f32 %v847, %v852
  %856 = vrot.lane.b32.xlu0 %v854, 32
  %v857 = vpop.permute.xlu0 %856
  %v859 = vadd.f32 %v849, %v857
  %v860 = vtanh.pop %v859
  %862 = vrot.lane.b32.xlu0 %v860, 64
  %v863 = vpop.permute.xlu0 %862
  %v865 = vmul.f32 %v847, %v863
  %867 = vrot.lane.b32.xlu0 %v865, 32
  %v868 = vpop.permute.xlu0 %867
  %v869 = vsel %vm167, %v868, 0
  %871 = vmatprep.subr.mxu0 0.0
  %872 = vmatpush1.msra.mxu0 %v163
  %873 = vmatprep.subr.mxu0 0.0
  %874 = vmatpush1.msra.mxu0 %v164
  %875 = vmatprep.subr.mxu0 0.0
  %876 = vmatpush1.msra.mxu0 %v165
  %877 = vmatprep.subr.mxu0 0.0
  %878 = vmatpush1.msra.mxu0 %v166
  %879 = vmatprep.subr.mxu0 0.0
  %880 = vmatpush1.msra.mxu0 0.0
  %881 = vmatprep.subr.mxu0 0.0
  %882 = vmatpush1.msra.mxu0 0.0
  %883 = vmatprep.subr.mxu0 0.0
  %884 = vmatpush1.msra.mxu0 0.0
  %885 = vmatprep.subr.mxu0 0.0
  %886 = vmatpush1.msra.mxu0 0.0
  %887 = vmatprep.subr.mxu0 0.0
  %888 = vmatpush1.msra.mxu0 0.0
  %889 = vmatprep.subr.mxu0 0.0
  %890 = vmatpush1.msra.mxu0 0.0
  %891 = vmatprep.subr.mxu0 0.0
  %892 = vmatpush1.msra.mxu0 0.0
  %893 = vmatprep.subr.mxu0 0.0
  %894 = vmatpush1.msra.mxu0 0.0
  %895 = vmatprep.subr.mxu0 0.0
  %896 = vmatpush1.msra.mxu0 0.0
  %897 = vmatprep.subr.mxu0 0.0
  %898 = vmatpush1.msra.mxu0 0.0
  %899 = vmatprep.subr.mxu0 0.0
  %900 = vmatpush1.msra.mxu0 0.0
  %901 = vmatprep.subr.mxu0 0.0
  %902 = vmatpush1.msra.mxu0 0.0
  %903 = vmatprep.subr.mxu0 0.0
  %904 = vmatpush1.msra.mxu0 0.0
  %905 = vmatprep.subr.mxu0 0.0
  %906 = vmatpush1.msra.mxu0 0.0
  %907 = vmatprep.subr.mxu0 0.0
  %908 = vmatpush1.msra.mxu0 0.0
  %909 = vmatprep.subr.mxu0 0.0
  %910 = vmatpush1.msra.mxu0 0.0
  %911 = vmatprep.subr.mxu0 0.0
  %912 = vmatpush1.msra.mxu0 0.0
  %913 = vmatprep.subr.mxu0 0.0
  %914 = vmatpush1.msra.mxu0 0.0
  %915 = vmatprep.subr.mxu0 0.0
  %916 = vmatpush1.msra.mxu0 0.0
  %917 = vmatprep.subr.mxu0 0.0
  %918 = vmatpush1.msra.mxu0 0.0
  %919 = vmatprep.subr.mxu0 0.0
  %920 = vmatpush1.msra.mxu0 0.0
  %921 = vmatprep.subr.mxu0 0.0
  %922 = vmatpush1.msra.mxu0 0.0
  %923 = vmatprep.subr.mxu0 0.0
  %924 = vmatpush1.msra.mxu0 0.0
  %925 = vmatprep.subr.mxu0 0.0
  %926 = vmatpush1.msra.mxu0 0.0
  %927 = vmatprep.subr.mxu0 0.0
  %928 = vmatpush1.msra.mxu0 0.0
  %929 = vmatprep.subr.mxu0 0.0
  %930 = vmatpush1.msra.mxu0 0.0
  %931 = vmatprep.subr.mxu0 0.0
  %932 = vmatpush1.msra.mxu0 0.0
  %933 = vmatprep.subr.mxu0 0.0
  %934 = vmatpush1.msra.mxu0 0.0
  %935 = vmatprep.mubr.f32.mxu0 0.0
  %936 = vmatmul.mubr.f32.gmra.mrb[0].mxu0 %v869
  %v937 = vpop.f32.mrb[0].mxu0
  %v938 = vadd.f32 0.0, %v937
  %v939 = vpop.f32.mrb[0].mxu0
  %940 = vdwg.mxu0
  %v941 = vadd.f32 %v160, %v938
  %v942 = vxor.u32 %v941, 2147483648
  %v943 = vmul.f32 %v942, 1.442695
  %v944 = vpow.pop %v943
  %v945 = vadd.f32 %v944, 1.0
  %v946 = vrcp.pop %v945
  %v947 = vmul.f32 1.0, %v946
  %v948 = vtanh.pop %v941
  %v949 = vmul.f32 %v947, %v859
  %951 = vrot.lane.b32.xlu0 %v948, 64
  %v952 = vpop.permute.xlu0 %951
  %v954 = vmul.f32 %v947, %v952
  %956 = vrot.lane.b32.xlu0 %v954, 32
  %v957 = vpop.permute.xlu0 %956
  %v959 = vadd.f32 %v949, %v957
  %v960 = vtanh.pop %v959
  %962 = vrot.lane.b32.xlu0 %v960, 64
  %v963 = vpop.permute.xlu0 %962
  %v965 = vmul.f32 %v947, %v963
  %967 = vrot.lane.b32.xlu0 %v965, 32
  %v968 = vpop.permute.xlu0 %967
  %v970 = vsel %vm167, %v968, %v959
  %vm971 = vcmask 523264
  %972 = vst.msk [vmem:[%s4] sm:$0xff] %vm971, %v970
  // Predicated region
  $region18: #{encoder_forward.1} parent=0 // pred_check
    _
  $region19: #{encoder_forward.1} parent=0 // pred_check_branch
    %974 = sbr.rel (0) target = $region21
  $region20: #{encoder_forward.1} parent=0 // pred_region
    _
  $region21: #{encoder_forward.1} parent=0 // pred_fallthru
    _
  // Predicated region
  $region22: #{encoder_forward.1} parent=0 // pred_check
    _
  $region23: #{encoder_forward.1} parent=0 // pred_check_branch
    %976 = sbr.rel (0) target = $region25
  $region24: #{encoder_forward.1} parent=0 // pred_region
    _
  $region25: #{encoder_forward.1} parent=0 // pred_fallthru
    _

</llo_original>
